<compile_context>
chip_gen: v7x
topology: tpu7x:2x2x1
jax: 0.10.0
libtpu: 0.0.40
codegen_flags: <defaults>
</compile_context>

<pallas_src>
import jax
import jax.numpy as jnp
from jax import lax
from jax.experimental import pallas as pl
from jax.experimental.pallas import tpu as pltpu


# ----------------------------- small helpers --------------------------------

def _cdiv(a, b):
    return -(-a // b)


def _round_up(x, m):
    return ((x + m - 1) // m) * m


def _sublane(itemsize):
    # Sublane packing multiple for the second-minor dim of a block.
    return {4: 8, 2: 16, 1: 32}.get(itemsize, 8)


def _vmem_capacity_bytes():
    try:
        return int(pltpu.get_tpu_info().vmem_capacity_bytes)
    except Exception:
        return 64 << 20  # conservative fallback (v7x physical per TC)


def _choose_tile(n, *, sublane, target, cap):
    """Pick (num_steps, tile): tile sublane-aligned, <= ~cap rows, and sized so
    the last tile is nearly full (minimal padded-row waste).  Forces >= 2 steps
    when there is enough work so the 'parallel' grid axis actually gives both
    v7x TensorCores rows to issue."""
    cap = max(sublane, (cap // sublane) * sublane)
    target = max(sublane, min(target, cap))
    num_steps = _cdiv(n, target)
    if num_steps == 1 and n >= 2 * sublane:
        num_steps = 2
    tile = _round_up(_cdiv(n, num_steps), sublane)
    return num_steps, tile


# --------------------- fast path: VMEM-resident one-hot ---------------------

def _onehot_kernel(ids_ref, table_ref, out_ref):
    """ids_ref: (tile, 1) i32 VMEM, table_ref: (V, D) VMEM (resident),
    out_ref: (tile, D)."""
    tile = out_ref.shape[0]
    tab = table_ref[...]
    v = tab.shape[0]
    ids = ids_ref[...]                                        # (tile, 1)
    cols = lax.broadcasted_iota(jnp.int32, (tile, v), 1)      # lane-dim iota
    onehot = (cols == ids).astype(tab.dtype)
    # HIGHEST precision keeps the one-hot matmul an exact gather for f32.
    acc = jnp.dot(onehot, tab,
                  preferred_element_type=jnp.float32,
                  precision=lax.Precision.HIGHEST)
    out_ref[...] = acc.astype(out_ref.dtype)


def _embedding_small(ids_flat, table):
    v, d = table.shape
    dtype = table.dtype
    sub = _sublane(dtype.itemsize)
    n = ids_flat.shape[0]

    # Lane-dense output: pad D to a 128 multiple (cheap -- the table is small).
    d_pad = _round_up(d, 128)
    if d_pad != d:
        table = jnp.pad(table, ((0, 0), (0, d_pad - d)))

    # Keep the (tile, V) one-hot and the double-buffered out block small.
    cap = max(sub, (2 << 20) // max(1, v * 4))
    num_steps, tile = _choose_tile(n, sublane=sub, target=256, cap=cap)
    n_pad = num_steps * tile
    ids2d = jnp.pad(ids_flat, (0, n_pad - n)).reshape(n_pad, 1)

    out = pl.pallas_call(
        _onehot_kernel,
        out_shape=jax.ShapeDtypeStruct((n_pad, d_pad), dtype),
        grid=(num_steps,),
        in_specs=[
            pl.BlockSpec((tile, 1), lambda i: (i, 0)),
            pl.BlockSpec((v, d_pad), lambda i: (0, 0)),   # VMEM-resident table
        ],
        out_specs=pl.BlockSpec((tile, d_pad), lambda i: (i, 0)),
        compiler_params=pltpu.CompilerParams(
            dimension_semantics=("parallel",),
        ),
    )(ids2d, table)
    return out[:n, :d]


# ------------------- slow path: HBM DMA gather (big vocab) ------------------

_CHUNK = 32     # rows per aggregate DMA wait
_UNROLL = 8     # DMA-start issue-loop unroll


def _gather_kernel(ids_ref, table_ref, out_ref, sem):
    """DMA-gather `tile` table rows from HBM into the VMEM output block.

    ids_ref   : (n_pad,) int32 in SMEM (scalar prefetch)
    table_ref : (V, D) ref left in HBM (memory_space=pl.ANY)
    out_ref   : (tile, D) VMEM output block (direct DMA destination)
    sem       : one DMA semaphore; it counts bytes, so one wait whose
                descriptor spans a whole chunk drains that chunk's row copies.
    """
    tile = out_ref.shape[0]                      # static Python int
    base = pl.program_id(0) * tile

    # Static chunk schedule: full 32-row chunks plus one remainder chunk.
    chunks = [(c, _CHUNK) for c in range(0, tile - tile % _CHUNK, _CHUNK)]
    if tile % _CHUNK:
        chunks.append((tile - tile % _CHUNK, tile % _CHUNK))

    def start_chunk(off, size):
        def body(r, carry):
            row = ids_ref[base + off + r]
            pltpu.make_async_copy(
                table_ref.at[pl.ds(row, 1), :],
                out_ref.at[pl.ds(off + r, 1), :],
                sem,
            ).start()
            return carry
        lax.fori_loop(0, size, body, 0, unroll=min(_UNROLL, size))

    def wait_chunk(off, size):
        # Aggregate wait: descriptor covers `size` rows, i.e. exactly the bytes
        # signalled by this chunk's `size` single-row copies.
        pltpu.make_async_copy(
            table_ref.at[pl.ds(0, size), :],
            out_ref.at[pl.ds(off, size), :],
            sem,
        ).wait()

    # Rolling window: chunk c+1's starts are in flight before chunk c's wait,
    # so issue and drain stay overlapped with <= 2*_CHUNK outstanding copies.
    start_chunk(*chunks[0])
    for c, (off, size) in enumerate(chunks):
        if c + 1 < len(chunks):
            start_chunk(*chunks[c + 1])
        wait_chunk(off, size)


def _embedding_large(ids_flat, table):
    v, d = table.shape
    dtype = table.dtype
    itemsize = dtype.itemsize

    # Pack sub-32-bit rows into uint32 lanes (pairs/quads adjacent columns):
    # keeps the per-row DMA and output block 32-bit lane dense and multiplies
    # bytes moved per descriptor.
    ratio = 4 // itemsize if itemsize < 4 else 1
    pack = ratio if (ratio > 1 and d % ratio == 0) else 1
    if pack > 1:
        table_k = lax.bitcast_convert_type(
            table.reshape(v, d // pack, pack), jnp.uint32)
        kdtype, d_eff, sub, kitem = jnp.uint32, d // pack, 8, 4
    else:
        table_k, kdtype, d_eff, sub, kitem = table, dtype, d, _sublane(itemsize), itemsize

    n = ids_flat.shape[0]

    # Cap the row tile so the double-buffered output block stays well inside
    # the scoped-VMEM budget on every generation.
    out_budget = min(8 << 20, _vmem_capacity_bytes() // 8)
    cap = max(sub, out_budget // (2 * d_eff * kitem))
    num_steps, tile = _choose_tile(n, sublane=sub, target=256, cap=cap)
    n_pad = num_steps * tile
    ids_pad = jnp.pad(ids_flat, (0, n_pad - n))   # padded rows fetch row 0

    # Note: D is not padded to a lane multiple here -- padding a large HBM
    # table would cost a full copy; non-128-multiple widths take the
    # masked-store hit on the output block instead.
    # TODO(synk): chunk the ids prefetch for very large n (SMEM 1D padding).
    out = pl.pallas_call(
        _gather_kernel,
        out_shape=jax.ShapeDtypeStruct((n_pad, d_eff), kdtype),
        grid_spec=pltpu.PrefetchScalarGridSpec(
            num_scalar_prefetch=1,                       # ids -> SMEM
            grid=(num_steps,),
            in_specs=[pl.BlockSpec(memory_space=pl.ANY)],  # table stays in HBM
            out_specs=pl.BlockSpec((tile, d_eff), lambda i, ids: (i, 0)),
            scratch_shapes=[pltpu.SemaphoreType.DMA(())],
        ),
        compiler_params=pltpu.CompilerParams(
            dimension_semantics=("parallel",),           # v7x megacore split
        ),
    )(ids_pad, table_k)

    out = out[:n]
    if pack > 1:
        out = lax.bitcast_convert_type(out, dtype).reshape(n, d)
    return out


# ------------------------------ public wrapper -------------------------------

_FAST_TABLE_BYTES = 2 << 20   # keep the table VMEM-resident below this


@jax.jit
def discrete_embedding(ids, table):
    """Gato DiscreteEmbedding forward: ids (any int shape) -> ids.shape + (D,)."""
    v, d = table.shape
    lead_shape = ids.shape

    ids_flat = ids.reshape(-1).astype(jnp.int32)
    # nn.Embedding raises on out-of-range ids; we clamp instead so a bad id can
    # never become an out-of-bounds DMA / one-hot (documented divergence).
    ids_flat = jnp.clip(ids_flat, 0, v - 1)

    n = ids_flat.shape[0]
    if n == 0:
        return jnp.zeros((*lead_shape, d), dtype=table.dtype)

    if v * d * table.dtype.itemsize <= _FAST_TABLE_BYTES:
        out = _embedding_small(ids_flat, table)
    else:
        out = _embedding_large(ids_flat, table)
    return out.reshape(*lead_shape, d)


# ---------------------------------- demo -------------------------------------

if __name__ == "__main__":
    key = jax.random.PRNGKey(0)
    k1, k2, k3, k4, k5, k6, k7, k8 = jax.random.split(key, 8)

    # 1) Gato-like config: embedding_input_size=128, layer_width=128 (fast path).
    V1, D1, B, S = 128, 128, 2, 8
    table1 = jax.random.normal(k1, (V1, D1), dtype=jnp.float32)
    ids1 = jax.random.randint(k2, (B, S), 0, V1, dtype=jnp.int32)
    out1 = jax.block_until_ready(discrete_embedding(ids1, table1))
    ref1 = jnp.take(table1, ids1, axis=0)
    assert out1.shape == (B, S, D1)
    assert jnp.allclose(out1, ref1, atol=1e-5, rtol=1e-5)

    # 2) Odd vocab, wider width, multi-step grid (still the fast path).
    V2, D2 = 1000, 256
    table2 = jax.random.normal(k3, (V2, D2), dtype=jnp.float32)
    ids2 = jax.random.randint(k4, (3, 100), 0, V2, dtype=jnp.int32)
    out2 = jax.block_until_ready(discrete_embedding(ids2, table2))
    ref2 = jnp.take(table2, ids2, axis=0)
    assert out2.shape == (3, 100, D2)
    assert jnp.allclose(out2, ref2, atol=1e-5, rtol=1e-5)

    # 3) Large f32 table (> fast-path threshold): HBM DMA-gather path.
    V3, D3 = 6000, 128
    table3 = jax.random.normal(k5, (V3, D3), dtype=jnp.float32)
    ids3 = jax.random.randint(k6, (4, 75), 0, V3, dtype=jnp.int32)
    out3 = jax.block_until_ready(discrete_embedding(ids3, table3))
    ref3 = jnp.take(table3, ids3, axis=0)
    assert out3.shape == (4, 75, D3)
    assert jnp.array_equal(out3, ref3)          # pure copy -> bit exact

    # 4) Large bf16 table: DMA-gather path with uint32 column packing.
    V4, D4 = 12000, 192
    table4 = jax.random.normal(k7, (V4, D4), dtype=jnp.bfloat16)
    ids4 = jax.random.randint(k8, (2, 50), 0, V4, dtype=jnp.int32)
    out4 = jax.block_until_ready(discrete_embedding(ids4, table4))
    ref4 = jnp.take(table4, ids4, axis=0)
    assert out4.shape == (2, 50, D4)
    assert jnp.array_equal(out4, ref4)

    print("KERNEL_OK")
</pallas_src>

<mosaic_0001>
module attributes {stable_mosaic.version = 11 : i64} {
  func.func @_onehot_kernel(%arg0: i32, %arg1: memref<8x1xi32, #tpu.memory_space<vmem>>, %arg2: memref<128x128xf32, #tpu.memory_space<vmem>>, %arg3: memref<8x128xf32, #tpu.memory_space<vmem>>) attributes {dimension_semantics = [#tpu.dimension_semantics<parallel>], iteration_bounds = array<i64: 2>, scalar_prefetch = 0 : i64, scratch_operands = 0 : i64, tpu.core_type = #tpu.core_type<tc>, window_params = [{transform_indices = @transform_0, window_bounds = array<i64: 8, 1>}, {pipeline_mode = #tpu.pipeline_mode<synchronous>, transform_indices = @transform_1, window_bounds = array<i64: 128, 128>}, {transform_indices = @transform_2, window_bounds = array<i64: 8, 128>}]} {
    %c0 = arith.constant 0 : index
    %c0_0 = arith.constant 0 : index
    %0 = vector.load %arg2[%c0, %c0_0] : memref<128x128xf32, #tpu.memory_space<vmem>>, vector<128x128xf32>
    %c0_1 = arith.constant 0 : index
    %c0_2 = arith.constant 0 : index
    %1 = vector.load %arg1[%c0_1, %c0_2] : memref<8x1xi32, #tpu.memory_space<vmem>>, vector<8x1xi32>
    %2 = tpu.iota {dimensions = array<i32: 1>} : vector<8x128xi32>
    %3 = vector.broadcast %1 : vector<8x1xi32> to vector<8x128xi32>
    %4 = arith.cmpi eq, %2, %3 : vector<8x128xi32>
    %5 = arith.extui %4 : vector<8x128xi1> to vector<8x128xi32>
    %6 = arith.sitofp %5 : vector<8x128xi32> to vector<8x128xf32>
    %cst = arith.constant dense<0.000000e+00> : vector<8x128xf32>
    %7 = tpu.matmul %6, %0, %cst {dimension_numbers = #tpu.dot_dimension_numbers<[1], [0], [0], [1], [0, 0, 1, 1], [], []>, precision = #tpu.contract_precision<fp32>} : vector<8x128xf32>, vector<128x128xf32>, vector<8x128xf32> -> vector<8x128xf32>
    %c0_3 = arith.constant 0 : index
    %c0_4 = arith.constant 0 : index
    %8 = vector.load %arg3[%c0_3, %c0_4] : memref<8x128xf32, #tpu.memory_space<vmem>>, vector<8x128xf32>
    tpu.vector_store %arg3[%c0_3, %c0_4], %7 {strides = array<i32>} : memref<8x128xf32, #tpu.memory_space<vmem>>, vector<8x128xf32>,
    return
  }
  func.func @transform_0(%arg0: i32) -> (i32, i32) {
    %c0_i32 = arith.constant 0 : i32
    %c0_i32_0 = arith.constant 0 : i32
    return %arg0, %c0_i32 : i32, i32
  }
  func.func @transform_1(%arg0: i32) -> (i32, i32) {
    %c0_i32 = arith.constant 0 : i32
    %c0_i32_0 = arith.constant 0 : i32
    %c0_i32_1 = arith.constant 0 : i32
    return %c0_i32, %c0_i32_0 : i32, i32
  }
  func.func @transform_2(%arg0: i32) -> (i32, i32) {
    %c0_i32 = arith.constant 0 : i32
    %c0_i32_0 = arith.constant 0 : i32
    return %arg0, %c0_i32 : i32, i32
  }
}

</mosaic_0001>

<llo_original>
// kernel: discrete_embedding.1
$region0: #{discrete_embedding.1}
  #allocation0 [shape = 'u32[]', space=smem, size = 0x4, offset = 0x4, fixed_abs, tag = 'smem constant byte address 0x4 - core index']
  #allocation1 [shape = 'u32[144,128]{1,0:T(1,128)}', space=vmem, size = 0x12000, scoped, tag = 'internal scratch']
  %s0 = inlined_call_operand.vmem [shape: s32[16,1], index: 0, kind: input, shape index: {}]
  %s1 = inlined_call_operand.hbm [shape: f32[128,128], index: 1, kind: input, shape index: {}]
  %s2 = inlined_call_operand.hbm [shape: f32[16,128], index: 2, kind: output, shape index: {}]
  %s3 = sld [smem:[#allocation0]]
  $region45: #{discrete_embedding.1} parent=0
    _
  %s5 = ssub.s32 1, %s3
  %s6 = scalar_select 0, %s5, %s3
  $region1: #{discrete_embedding.1} parent=0
    #allocation2 [shape = 'u8[65536]{0}', space=vmem, size = 0x10000, scoped, tag = 'input window, operand 1, single buffered']
    #allocation3 [shape = 's32[2]{0}', space=sflag, size = 0x8, scoped, tag = 'scoped memory for discrete_embedding.1']
    #allocation4 [shape = 's32[2]{0}', space=sflag, size = 0x8, scoped, tag = 'scoped memory for discrete_embedding.1']
    #allocation5 [shape = 'u8[8192]{0}', space=vmem, size = 0x2000, scoped, tag = 'output window, operand 0']
    %7 = vsyncpa [#allocation3], 0
    %8 = vsyncpa [#allocation4], 0
    %s9 = scalar_lea.sflag [#allocation4], 1
    %10 = vsyncpa %s9, 0
    loop: start=0, step=1, limit=4
    $region2: #{discrete_embedding.1} parent=1 // loop_pre_header
      _
    $region3: #{discrete_embedding.1} parent=1 // loop_header
      %s12 = sphi 0, %s16
      %p13 = scmp.ge.s32.totalorder %s12, 4
      %s22 = sphi 0, %s24
      %s25 = sphi 0, %s22
      %s26 = sphi 0, %s25
      %s42 = sphi 0, %s26
      %s46 = sphi 0, %s46
      %s48 = sphi 0, %s46
      %s49 = sphi 0, %s48
      %s63 = sphi 0, %s49
      %s69 = sphi 0, %s71
      %s72 = sphi 0, %s69
      %s73 = sphi 0, %s72
      %s89 = sphi 0, %s73
    $region4: #{discrete_embedding.1} parent=1 // loop_header_branch
      %15 = sbr.rel (%p13) target = $region8
    $region5: #{discrete_embedding.1} parent=1 // loop_body
      %s17 = ssub.s32 %s12, 1
      %s18 = ssub.s32 %s12, 2
      %s19 = sadd.s32 %s12, 1
      %s20 = ssub.s32 %s12, %s19
      %p21 = scmp.eq.s32.totalorder %s20, 0
      %s23 = sadd.s32 %s22, 1
      %s24 = scalar_select %p21, %s22, %s23
      %p27 = pneg %p21
      %p28 = scmp.eq.s32.totalorder %s12, 1
      %p29 = por %p27, %p28
      %p30 = scmp.ne.s32.totalorder %s22, %s25
      %p31 = scmp.eq.s32.totalorder %s12, 0
      %p32 = por %p30, %p31
      %p33 = scmp.ne.s32.totalorder %s22, %s25
      %p34 = scmp.eq.s32.totalorder %s17, 1
      %p35 = por %p33, %p34
      %p36 = scmp.ne.s32.totalorder %s25, %s26
      %p37 = scmp.eq.s32.totalorder %s17, 0
      %p38 = por %p36, %p37
      %p39 = scmp.ne.s32.totalorder %s25, %s26
      %p40 = scmp.eq.s32.totalorder %s18, 1
      %p41 = por %p39, %p40
      %p43 = scmp.ne.s32.totalorder %s26, %s42
      %p44 = scmp.eq.s32.totalorder %s18, 0
      %p45 = por %p43, %p44
      %s47 = sadd.s32 %s46, 1
      %p50 = scmp.eq.s32.totalorder %s12, 1
      %p51 = scmp.ne.s32.totalorder %s46, %s48
      %p52 = scmp.eq.s32.totalorder %s12, 0
      %p53 = por %p51, %p52
      %p54 = scmp.ne.s32.totalorder %s46, %s48
      %p55 = scmp.eq.s32.totalorder %s17, 1
      %p56 = por %p54, %p55
      %p57 = scmp.ne.s32.totalorder %s48, %s49
      %p58 = scmp.eq.s32.totalorder %s17, 0
      %p59 = por %p57, %p58
      %p60 = scmp.ne.s32.totalorder %s48, %s49
      %p61 = scmp.eq.s32.totalorder %s18, 1
      %p62 = por %p60, %p61
      %p64 = scmp.ne.s32.totalorder %s49, %s63
      %p65 = scmp.eq.s32.totalorder %s18, 0
      %p66 = por %p64, %p65
      %s67 = ssub.s32 %s12, %s19
      %p68 = scmp.eq.s32.totalorder %s67, 0
      %s70 = sadd.s32 %s69, 1
      %s71 = scalar_select %p68, %s69, %s70
      %p74 = pneg %p68
      %p75 = scmp.eq.s32.totalorder %s12, 1
      %p76 = por %p74, %p75
      %p77 = scmp.ne.s32.totalorder %s69, %s72
      %p78 = scmp.eq.s32.totalorder %s12, 0
      %p79 = por %p77, %p78
      %p80 = scmp.ne.s32.totalorder %s69, %s72
      %p81 = scmp.eq.s32.totalorder %s17, 1
      %p82 = por %p80, %p81
      %p83 = scmp.ne.s32.totalorder %s72, %s73
      %p84 = scmp.eq.s32.totalorder %s17, 0
      %p85 = por %p83, %p84
      %p86 = scmp.ne.s32.totalorder %s72, %s73
      %p87 = scmp.eq.s32.totalorder %s18, 1
      %p88 = por %p86, %p87
      %p90 = scmp.ne.s32.totalorder %s73, %s89
      %p91 = scmp.eq.s32.totalorder %s18, 0
      %p92 = por %p90, %p91
      %p93 = scmp.le.s32.totalorder 1, %s12
      %p94 = scmp.lt.s32.totalorder %s12, 3
      %p95 = pnand %p93, %p94
      %p96 = pneg %p95
      // Predicated region
      $region9: #{discrete_embedding.1} parent=5 // pred_check
        _
      $region10: #{discrete_embedding.1} parent=5 // pred_check_branch
        %98 = sbr.rel (%p95) target = $region12
      $region11: #{discrete_embedding.1} parent=5 // pred_region
        %s99 = ssub.s32 %s12, 1
        // Predicated region
        $region13: #{discrete_embedding.1} parent=11 // pred_check
          %p100 = pneg %p59
        $region14: #{discrete_embedding.1} parent=11 // pred_check_branch
          %102 = sbr.rel (%p100) target = $region16
        $region15: #{discrete_embedding.1} parent=11 // pred_region
          %s104 = ssub.s32 2048, 2048
          %105 = vsyncadd [#allocation3], %s104
          %s106 = sshll.u32 [#allocation2], 4
          %s107 = int_to_ptr.vmem [resolvable:$true] %s106
          %112 = dma.hbm_to_vmem [thread:$0]  %s1, 2048, %s107, [#allocation3], 128, 128, 8
        $region16: #{discrete_embedding.1} parent=11 // pred_fallthru
          _
      $region12: #{discrete_embedding.1} parent=5 // pred_fallthru
        _
      %p113 = scmp.lt.s32.totalorder %s12, 2
      // Predicated region
      $region17: #{discrete_embedding.1} parent=5 // pred_check
        %p114 = pneg %p113
      $region18: #{discrete_embedding.1} parent=5 // pred_check_branch
        %116 = sbr.rel (%p114) target = $region20
      $region19: #{discrete_embedding.1} parent=5 // pred_region
        // Predicated region
        $region21: #{discrete_embedding.1} parent=19 // pred_check
          %p117 = pneg %p32
        $region22: #{discrete_embedding.1} parent=19 // pred_check_branch
          %119 = sbr.rel (%p117) target = $region24
        $region23: #{discrete_embedding.1} parent=19 // pred_region
          %p120 = scmp.lt.s32.totalorder %s12, 1
          %s121 = scalar_select %p120, %s12, 1
          %s122 = smul.addr %s121, 8
          %s123 = scalar_lea.vmem %s0, %s122
        $region24: #{discrete_embedding.1} parent=19 // pred_fallthru
          _
      $region20: #{discrete_embedding.1} parent=5 // pred_fallthru
        _
      %p124 = scmp.le.s32.totalorder 1, %s12
      %p125 = scmp.lt.s32.totalorder %s12, 3
      %p126 = pnand %p124, %p125
      %p127 = pneg %p126
      // Predicated region
      $region25: #{discrete_embedding.1} parent=5 // pred_check
        _
      $region26: #{discrete_embedding.1} parent=5 // pred_check_branch
        %129 = sbr.rel (%p126) target = $region28
      $region27: #{discrete_embedding.1} parent=5 // pred_region
        %s130 = ssub.s32 %s12, 1
        // Predicated region
        $region29: #{discrete_embedding.1} parent=27 // pred_check
          %p131 = pneg %p59
        $region30: #{discrete_embedding.1} parent=27 // pred_check_branch
          %133 = sbr.rel (%p131) target = $region32
        $region31: #{discrete_embedding.1} parent=27 // pred_region
          %134 = dma.done [#allocation3], 2048
        $region32: #{discrete_embedding.1} parent=27 // pred_fallthru
          _
        %p135 = scmp.lt.s32.totalorder %s17, 1
        %s136 = scalar_select %p135, %s17, 1
        %s137 = smul.addr %s136, 8
        %s138 = scalar_lea.vmem %s0, %s137
        %p139 = pneg %p38
        %p140 = pneg %p35
        %p141 = pneg %p59
        %p142 = pneg %p56
        %p143 = pneg %p85
        %p144 = pneg %p82
        %s145 = sand.u32 %s72, 1
        %s146 = scalar_lea.sflag [#allocation4], %s145
        %s147 = sand.u32 %s72, 1
        %s148 = smul.addr %s147, 8
        %s149 = scalar_lea.vmem [#allocation5], %s148
        %p150 = scmp.lt.s32.totalorder %s17, 1
        %s151 = scalar_select %p150, %s17, 1
        %s152 = smul.addr %s151, 8
        %s153 = scalar_lea.vmem %s0, %s152
        %v154 = vld [vmem:[#allocation2] sm:$0xff]
        %v155 = vld [vmem:[#allocation2 + $0x8] sm:$0xff]
        %v156 = vld [vmem:[#allocation2 + $0x10] sm:$0xff]
        %v157 = vld [vmem:[#allocation2 + $0x18] sm:$0xff]
        %v158 = vld [vmem:[#allocation2 + $0x20] sm:$0xff]
        %v159 = vld [vmem:[#allocation2 + $0x28] sm:$0xff]
        %v160 = vld [vmem:[#allocation2 + $0x30] sm:$0xff]
        %v161 = vld [vmem:[#allocation2 + $0x38] sm:$0xff]
        %v162 = vld [vmem:[#allocation2 + $0x40] sm:$0xff]
        %v163 = vld [vmem:[#allocation2 + $0x48] sm:$0xff]
        %v164 = vld [vmem:[#allocation2 + $0x50] sm:$0xff]
        %v165 = vld [vmem:[#allocation2 + $0x58] sm:$0xff]
        %v166 = vld [vmem:[#allocation2 + $0x60] sm:$0xff]
        %v167 = vld [vmem:[#allocation2 + $0x68] sm:$0xff]
        %v168 = vld [vmem:[#allocation2 + $0x70] sm:$0xff]
        %v169 = vld [vmem:[#allocation2 + $0x78] sm:$0xff]
        %v170 = vld [vmem:[%s153] sm:$0xff]
        %v171 = vlaneseq
        %v172 = vand.u32 %v171, 127
        %173 = vset.pattern.permute.xlu0 0
        %174 = vperm.xlu0 %173, %v170
        %v175 = vpop.permute.xlu0 %174
        %vm176 = vcmp.eq.s32.totalorder %v172, %v175
        %v177 = vsel %vm176, 1, 0
        %v178 = vcvt.s32.f32 %v177
        %179 = vmatprep.subr.mxu0 0.0
        %v180 = vand.u32 %v154, 4294901760
        %181 = vmatpush1.msra.mxu0 %v180
        %182 = vmatprep.subr.mxu0 0.0
        %v183 = vand.u32 %v155, 4294901760
        %184 = vmatpush1.msra.mxu0 %v183
        %185 = vmatprep.subr.mxu0 0.0
        %v186 = vand.u32 %v156, 4294901760
        %187 = vmatpush1.msra.mxu0 %v186
        %188 = vmatprep.subr.mxu0 0.0
        %v189 = vand.u32 %v157, 4294901760
        %190 = vmatpush1.msra.mxu0 %v189
        %191 = vmatprep.subr.mxu0 0.0
        %v192 = vand.u32 %v158, 4294901760
        %193 = vmatpush1.msra.mxu0 %v192
        %194 = vmatprep.subr.mxu0 0.0
        %v195 = vand.u32 %v159, 4294901760
        %196 = vmatpush1.msra.mxu0 %v195
        %197 = vmatprep.subr.mxu0 0.0
        %v198 = vand.u32 %v160, 4294901760
        %199 = vmatpush1.msra.mxu0 %v198
        %200 = vmatprep.subr.mxu0 0.0
        %v201 = vand.u32 %v161, 4294901760
        %202 = vmatpush1.msra.mxu0 %v201
        %203 = vmatprep.subr.mxu0 0.0
        %v204 = vand.u32 %v162, 4294901760
        %205 = vmatpush1.msra.mxu0 %v204
        %206 = vmatprep.subr.mxu0 0.0
        %v207 = vand.u32 %v163, 4294901760
        %208 = vmatpush1.msra.mxu0 %v207
        %209 = vmatprep.subr.mxu0 0.0
        %v210 = vand.u32 %v164, 4294901760
        %211 = vmatpush1.msra.mxu0 %v210
        %212 = vmatprep.subr.mxu0 0.0
        %v213 = vand.u32 %v165, 4294901760
        %214 = vmatpush1.msra.mxu0 %v213
        %215 = vmatprep.subr.mxu0 0.0
        %v216 = vand.u32 %v166, 4294901760
        %217 = vmatpush1.msra.mxu0 %v216
        %218 = vmatprep.subr.mxu0 0.0
        %v219 = vand.u32 %v167, 4294901760
        %220 = vmatpush1.msra.mxu0 %v219
        %221 = vmatprep.subr.mxu0 0.0
        %v222 = vand.u32 %v168, 4294901760
        %223 = vmatpush1.msra.mxu0 %v222
        %224 = vmatprep.subr.mxu0 0.0
        %v225 = vand.u32 %v169, 4294901760
        %226 = vmatpush1.msra.mxu0 %v225
        %227 = vmatprep.subr.mxu0 0.0
        %228 = vmatpush1.msra.mxu0 0.0
        %229 = vmatprep.subr.mxu0 0.0
        %230 = vmatpush1.msra.mxu0 0.0
        %231 = vmatprep.subr.mxu0 0.0
        %232 = vmatpush1.msra.mxu0 0.0
        %233 = vmatprep.subr.mxu0 0.0
        %234 = vmatpush1.msra.mxu0 0.0
        %235 = vmatprep.subr.mxu0 0.0
        %236 = vmatpush1.msra.mxu0 0.0
        %237 = vmatprep.subr.mxu0 0.0
        %238 = vmatpush1.msra.mxu0 0.0
        %239 = vmatprep.subr.mxu0 0.0
        %240 = vmatpush1.msra.mxu0 0.0
        %241 = vmatprep.subr.mxu0 0.0
        %242 = vmatpush1.msra.mxu0 0.0
        %243 = vmatprep.subr.mxu0 0.0
        %244 = vmatpush1.msra.mxu0 0.0
        %245 = vmatprep.subr.mxu0 0.0
        %246 = vmatpush1.msra.mxu0 0.0
        %247 = vmatprep.subr.mxu0 0.0
        %248 = vmatpush1.msra.mxu0 0.0
        %249 = vmatprep.subr.mxu0 0.0
        %250 = vmatpush1.msra.mxu0 0.0
        %251 = vmatprep.subr.mxu0 0.0
        %252 = vmatpush1.msra.mxu0 0.0
        %253 = vmatprep.subr.mxu0 0.0
        %254 = vmatpush1.msra.mxu0 0.0
        %255 = vmatprep.subr.mxu0 0.0
        %256 = vmatpush1.msra.mxu0 0.0
        %257 = vmatprep.subr.mxu0 0.0
        %258 = vmatpush1.msra.mxu0 0.0
        %259 = vmatprep.mubr.f32.mxu0 0.0
        %v260 = vand.u32 %v178, 4294901760
        %v261 = vsub.f32 %v178, %v260
        %v262 = vand.u32 %v261, 4294901760
        %v263 = vsub.f32 %v261, %v262
        %v264 = vand.u32 %v263, 4294901760
        %265 = vmatmul.mubr.f32.gmra.mrb[0].mxu0 %v264
        %v266 = vpop.f32.mrb[0].mxu0
        %v267 = vadd.f32 0.0, %v266
        %v268 = vpop.f32.mrb[0].mxu0
        %269 = vdwg.mxu0
        %270 = vmatprep.subr.mxu0 0.0
        %v271 = vand.u32 %v154, 4294901760
        %v272 = vsub.f32 %v154, %v271
        %v273 = vand.u32 %v272, 4294901760
        %v274 = vsub.f32 %v272, %v273
        %v275 = vand.u32 %v274, 4294901760
        %276 = vmatpush1.msra.mxu0 %v275
        %277 = vmatprep.subr.mxu0 0.0
        %v278 = vand.u32 %v155, 4294901760
        %v279 = vsub.f32 %v155, %v278
        %v280 = vand.u32 %v279, 4294901760
        %v281 = vsub.f32 %v279, %v280
        %v282 = vand.u32 %v281, 4294901760
        %283 = vmatpush1.msra.mxu0 %v282
        %284 = vmatprep.subr.mxu0 0.0
        %v285 = vand.u32 %v156, 4294901760
        %v286 = vsub.f32 %v156, %v285
        %v287 = vand.u32 %v286, 4294901760
        %v288 = vsub.f32 %v286, %v287
        %v289 = vand.u32 %v288, 4294901760
        %290 = vmatpush1.msra.mxu0 %v289
        %291 = vmatprep.subr.mxu0 0.0
        %v292 = vand.u32 %v157, 4294901760
        %v293 = vsub.f32 %v157, %v292
        %v294 = vand.u32 %v293, 4294901760
        %v295 = vsub.f32 %v293, %v294
        %v296 = vand.u32 %v295, 4294901760
        %297 = vmatpush1.msra.mxu0 %v296
        %298 = vmatprep.subr.mxu0 0.0
        %v299 = vand.u32 %v158, 4294901760
        %v300 = vsub.f32 %v158, %v299
        %v301 = vand.u32 %v300, 4294901760
        %v302 = vsub.f32 %v300, %v301
        %v303 = vand.u32 %v302, 4294901760
        %304 = vmatpush1.msra.mxu0 %v303
        %305 = vmatprep.subr.mxu0 0.0
        %v306 = vand.u32 %v159, 4294901760
        %v307 = vsub.f32 %v159, %v306
        %v308 = vand.u32 %v307, 4294901760
        %v309 = vsub.f32 %v307, %v308
        %v310 = vand.u32 %v309, 4294901760
        %311 = vmatpush1.msra.mxu0 %v310
        %312 = vmatprep.subr.mxu0 0.0
        %v313 = vand.u32 %v160, 4294901760
        %v314 = vsub.f32 %v160, %v313
        %v315 = vand.u32 %v314, 4294901760
        %v316 = vsub.f32 %v314, %v315
        %v317 = vand.u32 %v316, 4294901760
        %318 = vmatpush1.msra.mxu0 %v317
        %319 = vmatprep.subr.mxu0 0.0
        %v320 = vand.u32 %v161, 4294901760
        %v321 = vsub.f32 %v161, %v320
        %v322 = vand.u32 %v321, 4294901760
        %v323 = vsub.f32 %v321, %v322
        %v324 = vand.u32 %v323, 4294901760
        %325 = vmatpush1.msra.mxu0 %v324
        %326 = vmatprep.subr.mxu0 0.0
        %v327 = vand.u32 %v162, 4294901760
        %v328 = vsub.f32 %v162, %v327
        %v329 = vand.u32 %v328, 4294901760
        %v330 = vsub.f32 %v328, %v329
        %v331 = vand.u32 %v330, 4294901760
        %332 = vmatpush1.msra.mxu0 %v331
        %333 = vmatprep.subr.mxu0 0.0
        %v334 = vand.u32 %v163, 4294901760
        %v335 = vsub.f32 %v163, %v334
        %v336 = vand.u32 %v335, 4294901760
        %v337 = vsub.f32 %v335, %v336
        %v338 = vand.u32 %v337, 4294901760
        %339 = vmatpush1.msra.mxu0 %v338
        %340 = vmatprep.subr.mxu0 0.0
        %v341 = vand.u32 %v164, 4294901760
        %v342 = vsub.f32 %v164, %v341
        %v343 = vand.u32 %v342, 4294901760
        %v344 = vsub.f32 %v342, %v343
        %v345 = vand.u32 %v344, 4294901760
        %346 = vmatpush1.msra.mxu0 %v345
        %347 = vmatprep.subr.mxu0 0.0
        %v348 = vand.u32 %v165, 4294901760
        %v349 = vsub.f32 %v165, %v348
        %v350 = vand.u32 %v349, 4294901760
        %v351 = vsub.f32 %v349, %v350
        %v352 = vand.u32 %v351, 4294901760
        %353 = vmatpush1.msra.mxu0 %v352
        %354 = vmatprep.subr.mxu0 0.0
        %v355 = vand.u32 %v166, 4294901760
        %v356 = vsub.f32 %v166, %v355
        %v357 = vand.u32 %v356, 4294901760
        %v358 = vsub.f32 %v356, %v357
        %v359 = vand.u32 %v358, 4294901760
        %360 = vmatpush1.msra.mxu0 %v359
        %361 = vmatprep.subr.mxu0 0.0
        %v362 = vand.u32 %v167, 4294901760
        %v363 = vsub.f32 %v167, %v362
        %v364 = vand.u32 %v363, 4294901760
        %v365 = vsub.f32 %v363, %v364
        %v366 = vand.u32 %v365, 4294901760
        %367 = vmatpush1.msra.mxu0 %v366
        %368 = vmatprep.subr.mxu0 0.0
        %v369 = vand.u32 %v168, 4294901760
        %v370 = vsub.f32 %v168, %v369
        %v371 = vand.u32 %v370, 4294901760
        %v372 = vsub.f32 %v370, %v371
        %v373 = vand.u32 %v372, 4294901760
        %374 = vmatpush1.msra.mxu0 %v373
        %375 = vmatprep.subr.mxu0 0.0
        %v376 = vand.u32 %v169, 4294901760
        %v377 = vsub.f32 %v169, %v376
        %v378 = vand.u32 %v377, 4294901760
        %v379 = vsub.f32 %v377, %v378
        %v380 = vand.u32 %v379, 4294901760
        %381 = vmatpush1.msra.mxu0 %v380
        %382 = vmatprep.subr.mxu0 0.0
        %383 = vmatpush1.msra.mxu0 0.0
        %384 = vmatprep.subr.mxu0 0.0
        %385 = vmatpush1.msra.mxu0 0.0
        %386 = vmatprep.subr.mxu0 0.0
        %387 = vmatpush1.msra.mxu0 0.0
        %388 = vmatprep.subr.mxu0 0.0
        %389 = vmatpush1.msra.mxu0 0.0
        %390 = vmatprep.subr.mxu0 0.0
        %391 = vmatpush1.msra.mxu0 0.0
        %392 = vmatprep.subr.mxu0 0.0
        %393 = vmatpush1.msra.mxu0 0.0
        %394 = vmatprep.subr.mxu0 0.0
        %395 = vmatpush1.msra.mxu0 0.0
        %396 = vmatprep.subr.mxu0 0.0
        %397 = vmatpush1.msra.mxu0 0.0
        %398 = vmatprep.subr.mxu0 0.0
        %399 = vmatpush1.msra.mxu0 0.0
        %400 = vmatprep.subr.mxu0 0.0
        %401 = vmatpush1.msra.mxu0 0.0
        %402 = vmatprep.subr.mxu0 0.0
        %403 = vmatpush1.msra.mxu0 0.0
        %404 = vmatprep.subr.mxu0 0.0
        %405 = vmatpush1.msra.mxu0 0.0
        %406 = vmatprep.subr.mxu0 0.0
        %407 = vmatpush1.msra.mxu0 0.0
        %408 = vmatprep.subr.mxu0 0.0
        %409 = vmatpush1.msra.mxu0 0.0
        %410 = vmatprep.subr.mxu0 0.0
        %411 = vmatpush1.msra.mxu0 0.0
        %412 = vmatprep.subr.mxu0 0.0
        %413 = vmatpush1.msra.mxu0 0.0
        %414 = vmatprep.mubr.f32.mxu0 0.0
        %v415 = vand.u32 %v178, 4294901760
        %416 = vmatmul.mubr.f32.gmra.mrb[0].mxu0 %v415
        %v417 = vpop.f32.mrb[0].mxu0
        %v418 = vadd.f32 %v267, %v417
        %v419 = vpop.f32.mrb[0].mxu0
        %420 = vdwg.mxu0
        %421 = vmatprep.subr.mxu0 0.0
        %v422 = vand.u32 %v154, 4294901760
        %v423 = vsub.f32 %v154, %v422
        %424 = vmatpush1.msra.mxu0 %v423
        %425 = vmatprep.subr.mxu0 0.0
        %v426 = vand.u32 %v155, 4294901760
        %v427 = vsub.f32 %v155, %v426
        %428 = vmatpush1.msra.mxu0 %v427
        %429 = vmatprep.subr.mxu0 0.0
        %v430 = vand.u32 %v156, 4294901760
        %v431 = vsub.f32 %v156, %v430
        %432 = vmatpush1.msra.mxu0 %v431
        %433 = vmatprep.subr.mxu0 0.0
        %v434 = vand.u32 %v157, 4294901760
        %v435 = vsub.f32 %v157, %v434
        %436 = vmatpush1.msra.mxu0 %v435
        %437 = vmatprep.subr.mxu0 0.0
        %v438 = vand.u32 %v158, 4294901760
        %v439 = vsub.f32 %v158, %v438
        %440 = vmatpush1.msra.mxu0 %v439
        %441 = vmatprep.subr.mxu0 0.0
        %v442 = vand.u32 %v159, 4294901760
        %v443 = vsub.f32 %v159, %v442
        %444 = vmatpush1.msra.mxu0 %v443
        %445 = vmatprep.subr.mxu0 0.0
        %v446 = vand.u32 %v160, 4294901760
        %v447 = vsub.f32 %v160, %v446
        %448 = vmatpush1.msra.mxu0 %v447
        %449 = vmatprep.subr.mxu0 0.0
        %v450 = vand.u32 %v161, 4294901760
        %v451 = vsub.f32 %v161, %v450
        %452 = vmatpush1.msra.mxu0 %v451
        %453 = vmatprep.subr.mxu0 0.0
        %v454 = vand.u32 %v162, 4294901760
        %v455 = vsub.f32 %v162, %v454
        %456 = vmatpush1.msra.mxu0 %v455
        %457 = vmatprep.subr.mxu0 0.0
        %v458 = vand.u32 %v163, 4294901760
        %v459 = vsub.f32 %v163, %v458
        %460 = vmatpush1.msra.mxu0 %v459
        %461 = vmatprep.subr.mxu0 0.0
        %v462 = vand.u32 %v164, 4294901760
        %v463 = vsub.f32 %v164, %v462
        %464 = vmatpush1.msra.mxu0 %v463
        %465 = vmatprep.subr.mxu0 0.0
        %v466 = vand.u32 %v165, 4294901760
        %v467 = vsub.f32 %v165, %v466
        %468 = vmatpush1.msra.mxu0 %v467
        %469 = vmatprep.subr.mxu0 0.0
        %v470 = vand.u32 %v166, 4294901760
        %v471 = vsub.f32 %v166, %v470
        %472 = vmatpush1.msra.mxu0 %v471
        %473 = vmatprep.subr.mxu0 0.0
        %v474 = vand.u32 %v167, 4294901760
        %v475 = vsub.f32 %v167, %v474
        %476 = vmatpush1.msra.mxu0 %v475
        %477 = vmatprep.subr.mxu0 0.0
        %v478 = vand.u32 %v168, 4294901760
        %v479 = vsub.f32 %v168, %v478
        %480 = vmatpush1.msra.mxu0 %v479
        %481 = vmatprep.subr.mxu0 0.0
        %v482 = vand.u32 %v169, 4294901760
        %v483 = vsub.f32 %v169, %v482
        %484 = vmatpush1.msra.mxu0 %v483
        %485 = vmatprep.subr.mxu0 0.0
        %486 = vmatpush1.msra.mxu0 0.0
        %487 = vmatprep.subr.mxu0 0.0
        %488 = vmatpush1.msra.mxu0 0.0
        %489 = vmatprep.subr.mxu0 0.0
        %490 = vmatpush1.msra.mxu0 0.0
        %491 = vmatprep.subr.mxu0 0.0
        %492 = vmatpush1.msra.mxu0 0.0
        %493 = vmatprep.subr.mxu0 0.0
        %494 = vmatpush1.msra.mxu0 0.0
        %495 = vmatprep.subr.mxu0 0.0
        %496 = vmatpush1.msra.mxu0 0.0
        %497 = vmatprep.subr.mxu0 0.0
        %498 = vmatpush1.msra.mxu0 0.0
        %499 = vmatprep.subr.mxu0 0.0
        %500 = vmatpush1.msra.mxu0 0.0
        %501 = vmatprep.subr.mxu0 0.0
        %502 = vmatpush1.msra.mxu0 0.0
        %503 = vmatprep.subr.mxu0 0.0
        %504 = vmatpush1.msra.mxu0 0.0
        %505 = vmatprep.subr.mxu0 0.0
        %506 = vmatpush1.msra.mxu0 0.0
        %507 = vmatprep.subr.mxu0 0.0
        %508 = vmatpush1.msra.mxu0 0.0
        %509 = vmatprep.subr.mxu0 0.0
        %510 = vmatpush1.msra.mxu0 0.0
        %511 = vmatprep.subr.mxu0 0.0
        %512 = vmatpush1.msra.mxu0 0.0
        %513 = vmatprep.subr.mxu0 0.0
        %514 = vmatpush1.msra.mxu0 0.0
        %515 = vmatprep.subr.mxu0 0.0
        %516 = vmatpush1.msra.mxu0 0.0
        %517 = vmatprep.mubr.f32.mxu0 0.0
        %v518 = vand.u32 %v178, 4294901760
        %v519 = vsub.f32 %v178, %v518
        %520 = vmatmul.mubr.f32.gmra.mrb[0].mxu0 %v519
        %v521 = vpop.f32.mrb[0].mxu0
        %v522 = vadd.f32 %v418, %v521
        %v523 = vpop.f32.mrb[0].mxu0
        %524 = vdwg.mxu0
        %525 = vmatprep.subr.mxu0 0.0
        %v526 = vand.u32 %v154, 4294901760
        %527 = vmatpush1.msra.mxu0 %v526
        %528 = vmatprep.subr.mxu0 0.0
        %v529 = vand.u32 %v155, 4294901760
        %530 = vmatpush1.msra.mxu0 %v529
        %531 = vmatprep.subr.mxu0 0.0
        %v532 = vand.u32 %v156, 4294901760
        %533 = vmatpush1.msra.mxu0 %v532
        %534 = vmatprep.subr.mxu0 0.0
        %v535 = vand.u32 %v157, 4294901760
        %536 = vmatpush1.msra.mxu0 %v535
        %537 = vmatprep.subr.mxu0 0.0
        %v538 = vand.u32 %v158, 4294901760
        %539 = vmatpush1.msra.mxu0 %v538
        %540 = vmatprep.subr.mxu0 0.0
        %v541 = vand.u32 %v159, 4294901760
        %542 = vmatpush1.msra.mxu0 %v541
        %543 = vmatprep.subr.mxu0 0.0
        %v544 = vand.u32 %v160, 4294901760
        %545 = vmatpush1.msra.mxu0 %v544
        %546 = vmatprep.subr.mxu0 0.0
        %v547 = vand.u32 %v161, 4294901760
        %548 = vmatpush1.msra.mxu0 %v547
        %549 = vmatprep.subr.mxu0 0.0
        %v550 = vand.u32 %v162, 4294901760
        %551 = vmatpush1.msra.mxu0 %v550
        %552 = vmatprep.subr.mxu0 0.0
        %v553 = vand.u32 %v163, 4294901760
        %554 = vmatpush1.msra.mxu0 %v553
        %555 = vmatprep.subr.mxu0 0.0
        %v556 = vand.u32 %v164, 4294901760
        %557 = vmatpush1.msra.mxu0 %v556
        %558 = vmatprep.subr.mxu0 0.0
        %v559 = vand.u32 %v165, 4294901760
        %560 = vmatpush1.msra.mxu0 %v559
        %561 = vmatprep.subr.mxu0 0.0
        %v562 = vand.u32 %v166, 4294901760
        %563 = vmatpush1.msra.mxu0 %v562
        %564 = vmatprep.subr.mxu0 0.0
        %v565 = vand.u32 %v167, 4294901760
        %566 = vmatpush1.msra.mxu0 %v565
        %567 = vmatprep.subr.mxu0 0.0
        %v568 = vand.u32 %v168, 4294901760
        %569 = vmatpush1.msra.mxu0 %v568
        %570 = vmatprep.subr.mxu0 0.0
        %v571 = vand.u32 %v169, 4294901760
        %572 = vmatpush1.msra.mxu0 %v571
        %573 = vmatprep.subr.mxu0 0.0
        %574 = vmatpush1.msra.mxu0 0.0
        %575 = vmatprep.subr.mxu0 0.0
        %576 = vmatpush1.msra.mxu0 0.0
        %577 = vmatprep.subr.mxu0 0.0
        %578 = vmatpush1.msra.mxu0 0.0
        %579 = vmatprep.subr.mxu0 0.0
        %580 = vmatpush1.msra.mxu0 0.0
        %581 = vmatprep.subr.mxu0 0.0
        %582 = vmatpush1.msra.mxu0 0.0
        %583 = vmatprep.subr.mxu0 0.0
        %584 = vmatpush1.msra.mxu0 0.0
        %585 = vmatprep.subr.mxu0 0.0
        %586 = vmatpush1.msra.mxu0 0.0
        %587 = vmatprep.subr.mxu0 0.0
        %588 = vmatpush1.msra.mxu0 0.0
        %589 = vmatprep.subr.mxu0 0.0
        %590 = vmatpush1.msra.mxu0 0.0
        %591 = vmatprep.subr.mxu0 0.0
        %592 = vmatpush1.msra.mxu0 0.0
        %593 = vmatprep.subr.mxu0 0.0
        %594 = vmatpush1.msra.mxu0 0.0
        %595 = vmatprep.subr.mxu0 0.0
        %596 = vmatpush1.msra.mxu0 0.0
        %597 = vmatprep.subr.mxu0 0.0
        %598 = vmatpush1.msra.mxu0 0.0
        %599 = vmatprep.subr.mxu0 0.0
        %600 = vmatpush1.msra.mxu0 0.0
        %601 = vmatprep.subr.mxu0 0.0
        %602 = vmatpush1.msra.mxu0 0.0
        %603 = vmatprep.subr.mxu0 0.0
        %604 = vmatpush1.msra.mxu0 0.0
        %605 = vmatprep.mubr.f32.mxu0 0.0
        %v606 = vand.u32 %v178, 4294901760
        %v607 = vsub.f32 %v178, %v606
        %v608 = vand.u32 %v607, 4294901760
        %609 = vmatmul.mubr.f32.gmra.mrb[0].mxu0 %v608
        %v610 = vpop.f32.mrb[0].mxu0
        %v611 = vadd.f32 %v522, %v610
        %v612 = vpop.f32.mrb[0].mxu0
        %613 = vdwg.mxu0
        %614 = vmatprep.subr.mxu0 0.0
        %v615 = vand.u32 %v154, 4294901760
        %v616 = vsub.f32 %v154, %v615
        %v617 = vand.u32 %v616, 4294901760
        %618 = vmatpush1.msra.mxu0 %v617
        %619 = vmatprep.subr.mxu0 0.0
        %v620 = vand.u32 %v155, 4294901760
        %v621 = vsub.f32 %v155, %v620
        %v622 = vand.u32 %v621, 4294901760
        %623 = vmatpush1.msra.mxu0 %v622
        %624 = vmatprep.subr.mxu0 0.0
        %v625 = vand.u32 %v156, 4294901760
        %v626 = vsub.f32 %v156, %v625
        %v627 = vand.u32 %v626, 4294901760
        %628 = vmatpush1.msra.mxu0 %v627
        %629 = vmatprep.subr.mxu0 0.0
        %v630 = vand.u32 %v157, 4294901760
        %v631 = vsub.f32 %v157, %v630
        %v632 = vand.u32 %v631, 4294901760
        %633 = vmatpush1.msra.mxu0 %v632
        %634 = vmatprep.subr.mxu0 0.0
        %v635 = vand.u32 %v158, 4294901760
        %v636 = vsub.f32 %v158, %v635
        %v637 = vand.u32 %v636, 4294901760
        %638 = vmatpush1.msra.mxu0 %v637
        %639 = vmatprep.subr.mxu0 0.0
        %v640 = vand.u32 %v159, 4294901760
        %v641 = vsub.f32 %v159, %v640
        %v642 = vand.u32 %v641, 4294901760
        %643 = vmatpush1.msra.mxu0 %v642
        %644 = vmatprep.subr.mxu0 0.0
        %v645 = vand.u32 %v160, 4294901760
        %v646 = vsub.f32 %v160, %v645
        %v647 = vand.u32 %v646, 4294901760
        %648 = vmatpush1.msra.mxu0 %v647
        %649 = vmatprep.subr.mxu0 0.0
        %v650 = vand.u32 %v161, 4294901760
        %v651 = vsub.f32 %v161, %v650
        %v652 = vand.u32 %v651, 4294901760
        %653 = vmatpush1.msra.mxu0 %v652
        %654 = vmatprep.subr.mxu0 0.0
        %v655 = vand.u32 %v162, 4294901760
        %v656 = vsub.f32 %v162, %v655
        %v657 = vand.u32 %v656, 4294901760
        %658 = vmatpush1.msra.mxu0 %v657
        %659 = vmatprep.subr.mxu0 0.0
        %v660 = vand.u32 %v163, 4294901760
        %v661 = vsub.f32 %v163, %v660
        %v662 = vand.u32 %v661, 4294901760
        %663 = vmatpush1.msra.mxu0 %v662
        %664 = vmatprep.subr.mxu0 0.0
        %v665 = vand.u32 %v164, 4294901760
        %v666 = vsub.f32 %v164, %v665
        %v667 = vand.u32 %v666, 4294901760
        %668 = vmatpush1.msra.mxu0 %v667
        %669 = vmatprep.subr.mxu0 0.0
        %v670 = vand.u32 %v165, 4294901760
        %v671 = vsub.f32 %v165, %v670
        %v672 = vand.u32 %v671, 4294901760
        %673 = vmatpush1.msra.mxu0 %v672
        %674 = vmatprep.subr.mxu0 0.0
        %v675 = vand.u32 %v166, 4294901760
        %v676 = vsub.f32 %v166, %v675
        %v677 = vand.u32 %v676, 4294901760
        %678 = vmatpush1.msra.mxu0 %v677
        %679 = vmatprep.subr.mxu0 0.0
        %v680 = vand.u32 %v167, 4294901760
        %v681 = vsub.f32 %v167, %v680
        %v682 = vand.u32 %v681, 4294901760
        %683 = vmatpush1.msra.mxu0 %v682
        %684 = vmatprep.subr.mxu0 0.0
        %v685 = vand.u32 %v168, 4294901760
        %v686 = vsub.f32 %v168, %v685
        %v687 = vand.u32 %v686, 4294901760
        %688 = vmatpush1.msra.mxu0 %v687
        %689 = vmatprep.subr.mxu0 0.0
        %v690 = vand.u32 %v169, 4294901760
        %v691 = vsub.f32 %v169, %v690
        %v692 = vand.u32 %v691, 4294901760
        %693 = vmatpush1.msra.mxu0 %v692
        %694 = vmatprep.subr.mxu0 0.0
        %695 = vmatpush1.msra.mxu0 0.0
        %696 = vmatprep.subr.mxu0 0.0
        %697 = vmatpush1.msra.mxu0 0.0
        %698 = vmatprep.subr.mxu0 0.0
        %699 = vmatpush1.msra.mxu0 0.0
        %700 = vmatprep.subr.mxu0 0.0
        %701 = vmatpush1.msra.mxu0 0.0
        %702 = vmatprep.subr.mxu0 0.0
        %703 = vmatpush1.msra.mxu0 0.0
        %704 = vmatprep.subr.mxu0 0.0
        %705 = vmatpush1.msra.mxu0 0.0
        %706 = vmatprep.subr.mxu0 0.0
        %707 = vmatpush1.msra.mxu0 0.0
        %708 = vmatprep.subr.mxu0 0.0
        %709 = vmatpush1.msra.mxu0 0.0
        %710 = vmatprep.subr.mxu0 0.0
        %711 = vmatpush1.msra.mxu0 0.0
        %712 = vmatprep.subr.mxu0 0.0
        %713 = vmatpush1.msra.mxu0 0.0
        %714 = vmatprep.subr.mxu0 0.0
        %715 = vmatpush1.msra.mxu0 0.0
        %716 = vmatprep.subr.mxu0 0.0
        %717 = vmatpush1.msra.mxu0 0.0
        %718 = vmatprep.subr.mxu0 0.0
        %719 = vmatpush1.msra.mxu0 0.0
        %720 = vmatprep.subr.mxu0 0.0
        %721 = vmatpush1.msra.mxu0 0.0
        %722 = vmatprep.subr.mxu0 0.0
        %723 = vmatpush1.msra.mxu0 0.0
        %724 = vmatprep.subr.mxu0 0.0
        %725 = vmatpush1.msra.mxu0 0.0
        %726 = vmatprep.mubr.f32.mxu0 0.0
        %v727 = vand.u32 %v178, 4294901760
        %728 = vmatmul.mubr.f32.gmra.mrb[0].mxu0 %v727
        %v729 = vpop.f32.mrb[0].mxu0
        %v730 = vadd.f32 %v611, %v729
        %v731 = vpop.f32.mrb[0].mxu0
        %732 = vdwg.mxu0
        %733 = vmatprep.subr.mxu0 0.0
        %v734 = vand.u32 %v154, 4294901760
        %735 = vmatpush1.msra.mxu0 %v734
        %736 = vmatprep.subr.mxu0 0.0
        %v737 = vand.u32 %v155, 4294901760
        %738 = vmatpush1.msra.mxu0 %v737
        %739 = vmatprep.subr.mxu0 0.0
        %v740 = vand.u32 %v156, 4294901760
        %741 = vmatpush1.msra.mxu0 %v740
        %742 = vmatprep.subr.mxu0 0.0
        %v743 = vand.u32 %v157, 4294901760
        %744 = vmatpush1.msra.mxu0 %v743
        %745 = vmatprep.subr.mxu0 0.0
        %v746 = vand.u32 %v158, 4294901760
        %747 = vmatpush1.msra.mxu0 %v746
        %748 = vmatprep.subr.mxu0 0.0
        %v749 = vand.u32 %v159, 4294901760
        %750 = vmatpush1.msra.mxu0 %v749
        %751 = vmatprep.subr.mxu0 0.0
        %v752 = vand.u32 %v160, 4294901760
        %753 = vmatpush1.msra.mxu0 %v752
        %754 = vmatprep.subr.mxu0 0.0
        %v755 = vand.u32 %v161, 4294901760
        %756 = vmatpush1.msra.mxu0 %v755
        %757 = vmatprep.subr.mxu0 0.0
        %v758 = vand.u32 %v162, 4294901760
        %759 = vmatpush1.msra.mxu0 %v758
        %760 = vmatprep.subr.mxu0 0.0
        %v761 = vand.u32 %v163, 4294901760
        %762 = vmatpush1.msra.mxu0 %v761
        %763 = vmatprep.subr.mxu0 0.0
        %v764 = vand.u32 %v164, 4294901760
        %765 = vmatpush1.msra.mxu0 %v764
        %766 = vmatprep.subr.mxu0 0.0
        %v767 = vand.u32 %v165, 4294901760
        %768 = vmatpush1.msra.mxu0 %v767
        %769 = vmatprep.subr.mxu0 0.0
        %v770 = vand.u32 %v166, 4294901760
        %771 = vmatpush1.msra.mxu0 %v770
        %772 = vmatprep.subr.mxu0 0.0
        %v773 = vand.u32 %v167, 4294901760
        %774 = vmatpush1.msra.mxu0 %v773
        %775 = vmatprep.subr.mxu0 0.0
        %v776 = vand.u32 %v168, 4294901760
        %777 = vmatpush1.msra.mxu0 %v776
        %778 = vmatprep.subr.mxu0 0.0
        %v779 = vand.u32 %v169, 4294901760
        %780 = vmatpush1.msra.mxu0 %v779
        %781 = vmatprep.subr.mxu0 0.0
        %782 = vmatpush1.msra.mxu0 0.0
        %783 = vmatprep.subr.mxu0 0.0
        %784 = vmatpush1.msra.mxu0 0.0
        %785 = vmatprep.subr.mxu0 0.0
        %786 = vmatpush1.msra.mxu0 0.0
        %787 = vmatprep.subr.mxu0 0.0
        %788 = vmatpush1.msra.mxu0 0.0
        %789 = vmatprep.subr.mxu0 0.0
        %790 = vmatpush1.msra.mxu0 0.0
        %791 = vmatprep.subr.mxu0 0.0
        %792 = vmatpush1.msra.mxu0 0.0
        %793 = vmatprep.subr.mxu0 0.0
        %794 = vmatpush1.msra.mxu0 0.0
        %795 = vmatprep.subr.mxu0 0.0
        %796 = vmatpush1.msra.mxu0 0.0
        %797 = vmatprep.subr.mxu0 0.0
        %798 = vmatpush1.msra.mxu0 0.0
        %799 = vmatprep.subr.mxu0 0.0
        %800 = vmatpush1.msra.mxu0 0.0
        %801 = vmatprep.subr.mxu0 0.0
        %802 = vmatpush1.msra.mxu0 0.0
        %803 = vmatprep.subr.mxu0 0.0
        %804 = vmatpush1.msra.mxu0 0.0
        %805 = vmatprep.subr.mxu0 0.0
        %806 = vmatpush1.msra.mxu0 0.0
        %807 = vmatprep.subr.mxu0 0.0
        %808 = vmatpush1.msra.mxu0 0.0
        %809 = vmatprep.subr.mxu0 0.0
        %810 = vmatpush1.msra.mxu0 0.0
        %811 = vmatprep.subr.mxu0 0.0
        %812 = vmatpush1.msra.mxu0 0.0
        %813 = vmatprep.mubr.f32.mxu0 0.0
        %v814 = vand.u32 %v178, 4294901760
        %815 = vmatmul.mubr.f32.gmra.mrb[0].mxu0 %v814
        %v816 = vpop.f32.mrb[0].mxu0
        %v817 = vadd.f32 %v730, %v816
        %v818 = vpop.f32.mrb[0].mxu0
        %819 = vdwg.mxu0
        %820 = vst [vmem:[%s149] sm:$0xff] %v817
        %s821 = sand.u32 %s72, 1
        %s822 = scalar_lea.sflag [#allocation4], %s821
        %s823 = sand.u32 %s72, 1
        %s824 = smul.addr %s823, 8
        %s825 = scalar_lea.vmem [#allocation5], %s824
        // Predicated region
        $region33: #{discrete_embedding.1} parent=27 // pred_check
          %p826 = pneg %p82
        $region34: #{discrete_embedding.1} parent=27 // pred_check_branch
          %828 = sbr.rel (%p826) target = $region36
        $region35: #{discrete_embedding.1} parent=27 // pred_region
          %s830 = ssub.s32 128, 128
          %831 = vsyncadd %s822, %s830
          %s832 = smul.addr %s17, 128
          %s833 = scalar_lea.hbm %s2, %s832
          %s835 = sshll.u32 %s825, 4
          %s836 = int_to_ptr.vmem [resolvable:$true] %s835
          %838 = dma.vmem_to_hbm [thread:$0]  %s836, 128, %s833, %s822
        $region36: #{discrete_embedding.1} parent=27 // pred_fallthru
          _
      $region28: #{discrete_embedding.1} parent=5 // pred_fallthru
        _
      %p839 = scmp.le.s32.totalorder 2, %s12
      // Predicated region
      $region37: #{discrete_embedding.1} parent=5 // pred_check
        %p840 = pneg %p839
      $region38: #{discrete_embedding.1} parent=5 // pred_check_branch
        %842 = sbr.rel (%p840) target = $region40
      $region39: #{discrete_embedding.1} parent=5 // pred_region
        %s843 = ssub.s32 %s12, 2
        // Predicated region
        $region41: #{discrete_embedding.1} parent=39 // pred_check
          %p844 = pneg %p88
        $region42: #{discrete_embedding.1} parent=39 // pred_check_branch
          %846 = sbr.rel (%p844) target = $region44
        $region43: #{discrete_embedding.1} parent=39 // pred_region
          %s847 = sand.u32 %s73, 1
          %s848 = scalar_lea.sflag [#allocation4], %s847
          %s849 = sand.u32 %s73, 1
          %s850 = smul.addr %s849, 8
          %s851 = scalar_lea.vmem [#allocation5], %s850
          %852 = dma.done %s848, 128
        $region44: #{discrete_embedding.1} parent=39 // pred_fallthru
          _
      $region40: #{discrete_embedding.1} parent=5 // pred_fallthru
        _
    $region6: #{discrete_embedding.1} parent=1 // loop_footer
      %s16 = sadd.s32 1, %s12
    $region7: #{discrete_embedding.1} parent=1 // loop_footer_branch
      %11 = sbr.rel target = $region3
    $region8: #{discrete_embedding.1} parent=1 // loop_exit
      _
    %853 = vsyncpa [#allocation3], 1
    %s854 = scalar_lea.sflag [#allocation3], 1
    %855 = vsyncpa %s854, 1
    %856 = vsyncpa [#allocation4], 1
    %s857 = scalar_lea.sflag [#allocation4], 1
    %858 = vsyncpa %s857, 1

</llo_original>
